<compile_context>
chip_gen: v7x
topology: tpu7x:2x2x1
jax: 0.10.0
libtpu: 0.0.40
codegen_flags: <defaults>
</compile_context>

<pallas_src>
import jax
import jax.numpy as jnp
from jax.experimental import pallas as pl
from jax.experimental.pallas import tpu as pltpu


STATE_DIM = 29
HIDDEN = 64
LATENT = 16
BATCH = 8

PAD = 128                     # lane-dense padded feature width for every layer
CARRY_X = STATE_DIM           # lane 29 of x carries the constant 1.0 (feeds b1)
CARRY_H1 = 127                # lane 127 of h1 carries 1.0 (feeds merged bias)
CARRY_T = 63                  # lane 63 of t carries 1.0 (feeds b4)
SLAB_ROWS = 3 * PAD           # three packed (128,128) weight blocks

# Carrier lanes must not collide with real outputs:
#   rep occupies t lanes [0,16); h2_pre occupies t lanes [64,128).
assert LATENT <= CARRY_T < HIDDEN
#   h1 real outputs occupy lanes [0,64); carrier sits at 127.
assert HIDDEN <= CARRY_H1 < PAD


# --------------------------------------------------------------------------- #
# Kernel: 3 lane-dense (B_pad,128)x(128,128) matmuls, biases ride in the slab.
# --------------------------------------------------------------------------- #
def _compressor_kernel(x_ref, slab_ref, out_ref):
    x = x_ref[...]                                  # (B_pad, 128); lane 29 = 1.0

    w1blk = slab_ref[0 * PAD:1 * PAD, :]            # w1 + b1 + carrier
    w2blk = slab_ref[1 * PAD:2 * PAD, :]            # [w2 | w2@w3] + merged bias + carrier
    w4blk = slab_ref[2 * PAD:3 * PAD, :]            # w4 (rows 64..127) + b4 (row 63)

    # layer 1 (+bias via ones-lane), ReLU; carrier 1.0 lands in h1 lane 127
    h1 = jnp.maximum(
        jnp.dot(x, w1blk, preferred_element_type=jnp.float32), 0.0)

    # merged layers 2+3 weights: t lanes [0,16) = rep, lanes [64,128) = pre-ReLU h2,
    # lane 63 = carrier 1.0
    t = jnp.dot(h1, w2blk, preferred_element_type=jnp.float32)

    # layer 4 (+b4 via carrier lane 63); rows [0,64) of w4blk outside b4/w4 are zero,
    # so relu(rep) / padded lanes contribute nothing.
    proj = jnp.dot(jnp.maximum(t, 0.0), w4blk,
                   preferred_element_type=jnp.float32)

    # Two 128-aligned unmasked stores (no concatenate temporary).
    out_ref[:, :PAD] = t.astype(out_ref.dtype)       # rep in lanes [0,16)
    out_ref[:, PAD:] = proj.astype(out_ref.dtype)    # proj in lanes [0,29)


# --------------------------------------------------------------------------- #
# Host-side packing (runs ONCE per parameter set) and jitted wrapper
# --------------------------------------------------------------------------- #
def pack_params(params):
    """Pack the 8 weight/bias arrays into one (384, 128) f32 slab.

    Block 1 rows [0,29): w1 in lanes [0,64); row 29: b1 in lanes [0,64) and a
      1.0 carrier at lane 127.
    Block 2 rows [0,64): w2 in lanes [0,16) and W23 = w2@w3 in lanes [64,128);
      row 127: b2 in lanes [0,16), b23 = b2@w3 + b3 in lanes [64,128), and a
      1.0 carrier at lane 63.
    Block 3 rows [64,128): w4 in lanes [0,29); row 63: b4 in lanes [0,29).
    """
    w1, b1, w2, b2, w3, b3, w4, b4 = [jnp.asarray(p, jnp.float32) for p in params]
    b1, b2, b3, b4 = (b.reshape(-1) for b in (b1, b2, b3, b4))

    blk1 = jnp.zeros((PAD, PAD), jnp.float32)
    blk1 = blk1.at[:STATE_DIM, :HIDDEN].set(w1)
    blk1 = blk1.at[CARRY_X, :HIDDEN].set(b1)
    blk1 = blk1.at[CARRY_X, CARRY_H1].set(1.0)

    w23 = w2 @ w3                       # (64, 64): folds layers 2 and 3
    b23 = b2 @ w3 + b3                  # (64,)
    blk2 = jnp.zeros((PAD, PAD), jnp.float32)
    blk2 = blk2.at[:HIDDEN, :LATENT].set(w2)
    blk2 = blk2.at[:HIDDEN, HIDDEN:2 * HIDDEN].set(w23)
    blk2 = blk2.at[CARRY_H1, :LATENT].set(b2)
    blk2 = blk2.at[CARRY_H1, HIDDEN:2 * HIDDEN].set(b23)
    blk2 = blk2.at[CARRY_H1, CARRY_T].set(1.0)

    blk3 = jnp.zeros((PAD, PAD), jnp.float32)
    blk3 = blk3.at[HIDDEN:2 * HIDDEN, :STATE_DIM].set(w4)
    blk3 = blk3.at[CARRY_T, :STATE_DIM].set(b4)

    return jnp.concatenate([blk1, blk2, blk3], axis=0)


def network_compressor_forward(state, slab):
    """state: (B, 29) f32, slab: (384, 128) packed params
    -> (representation (B, 16), projection (B, 29))."""
    B = state.shape[0]
    B_pad = max(8, ((B + 7) // 8) * 8)          # sublane-aligned batch

    # Lane-dense input: [state | 1.0 carrier | zeros], padded rows are zero.
    x = jnp.concatenate(
        [state.astype(jnp.float32),
         jnp.ones((B, 1), jnp.float32),
         jnp.zeros((B, PAD - STATE_DIM - 1), jnp.float32)], axis=1)
    x_pad = jnp.pad(x, ((0, B_pad - B), (0, 0)))

    vmem = pltpu.MemorySpace.VMEM
    out = pl.pallas_call(
        _compressor_kernel,
        out_shape=jax.ShapeDtypeStruct((B_pad, 2 * PAD), jnp.float32),
        in_specs=[pl.BlockSpec(memory_space=vmem),
                  pl.BlockSpec(memory_space=vmem)],
        out_specs=pl.BlockSpec(memory_space=vmem),
    )(x_pad, slab)

    representation = out[:B, :LATENT]
    projection = out[:B, PAD:PAD + STATE_DIM]
    return representation, projection


forward_jit = jax.jit(network_compressor_forward)


# --------------------------------------------------------------------------- #
# Parameter init + pure-JAX reference (unfolded, mirrors the nn.Linear layers)
# --------------------------------------------------------------------------- #
def init_params(key):
    ks = jax.random.split(key, 8)

    def lin(kw, kb, fan_in, fan_out):
        scale = 1.0 / jnp.sqrt(jnp.float32(fan_in))
        w = jax.random.uniform(kw, (fan_in, fan_out), jnp.float32, -scale, scale)
        b = jax.random.uniform(kb, (1, fan_out), jnp.float32, -scale, scale)
        return w, b

    w1, b1 = lin(ks[0], ks[1], STATE_DIM, HIDDEN)
    w2, b2 = lin(ks[2], ks[3], HIDDEN, LATENT)
    w3, b3 = lin(ks[4], ks[5], LATENT, HIDDEN)
    w4, b4 = lin(ks[6], ks[7], HIDDEN, STATE_DIM)
    return (w1, b1, w2, b2, w3, b3, w4, b4)


def _reference_forward(state, params):
    w1, b1, w2, b2, w3, b3, w4, b4 = params
    h1 = jnp.maximum(state @ w1 + b1, 0.0)
    rep = h1 @ w2 + b2
    h2 = jnp.maximum(rep @ w3 + b3, 0.0)
    proj = h2 @ w4 + b4
    return rep, proj


# TODO(synk): the AdamW training step, save()/load() checkpointing and the
# seaborn correlation plot have no Pallas equivalent; only forward() is ported.

if __name__ == "__main__":
    key = jax.random.PRNGKey(0)
    k_params, k_state = jax.random.split(key)

    params = init_params(k_params)
    state = jax.random.normal(k_state, (BATCH, STATE_DIM), jnp.float32)

    # Pack once; reuse the cached slab for every forward call.
    slab = jax.block_until_ready(pack_params(params))

    representation, projection = forward_jit(state, slab)
    jax.block_until_ready((representation, projection))

    rep_ref, proj_ref = _reference_forward(state, params)
    assert representation.shape == (BATCH, LATENT)
    assert projection.shape == (BATCH, STATE_DIM)
    assert jnp.allclose(representation, rep_ref, atol=1e-5, rtol=1e-5)
    assert jnp.allclose(projection, proj_ref, atol=1e-5, rtol=1e-5)

    print("KERNEL_OK")
</pallas_src>

<mosaic_0001>
module attributes {stable_mosaic.version = 11 : i64} {
  func.func @_compressor_kernel(%arg0: memref<8x128xf32, #tpu.memory_space<vmem>>, %arg1: memref<384x128xf32, #tpu.memory_space<vmem>>, %arg2: memref<8x256xf32, #tpu.memory_space<vmem>>) attributes {dimension_semantics = [], scalar_prefetch = 0 : i64, scratch_operands = 0 : i64, tpu.core_type = #tpu.core_type<tc>} {
    %c0 = arith.constant 0 : index
    %c0_0 = arith.constant 0 : index
    %0 = vector.load %arg0[%c0, %c0_0] : memref<8x128xf32, #tpu.memory_space<vmem>>, vector<8x128xf32>
    %c0_1 = arith.constant 0 : index
    %c0_2 = arith.constant 0 : index
    %1 = vector.load %arg1[%c0_1, %c0_2] : memref<384x128xf32, #tpu.memory_space<vmem>>, vector<128x128xf32>
    %c128 = arith.constant 128 : index
    %c0_3 = arith.constant 0 : index
    %2 = vector.load %arg1[%c128, %c0_3] : memref<384x128xf32, #tpu.memory_space<vmem>>, vector<128x128xf32>
    %c256 = arith.constant 256 : index
    %c0_4 = arith.constant 0 : index
    %3 = vector.load %arg1[%c256, %c0_4] : memref<384x128xf32, #tpu.memory_space<vmem>>, vector<128x128xf32>
    %cst = arith.constant dense<0.000000e+00> : vector<8x128xf32>
    %4 = tpu.matmul %0, %1, %cst {dimension_numbers = #tpu.dot_dimension_numbers<[1], [0], [0], [1], [0, 0, 1, 1], [], []>} : vector<8x128xf32>, vector<128x128xf32>, vector<8x128xf32> -> vector<8x128xf32>
    %cst_5 = arith.constant 0.000000e+00 : f32
    %5 = vector.broadcast %cst_5 : f32 to vector<8x128xf32>
    %6 = arith.maximumf %4, %5 : vector<8x128xf32>
    %cst_6 = arith.constant dense<0.000000e+00> : vector<8x128xf32>
    %7 = tpu.matmul %6, %2, %cst_6 {dimension_numbers = #tpu.dot_dimension_numbers<[1], [0], [0], [1], [0, 0, 1, 1], [], []>} : vector<8x128xf32>, vector<128x128xf32>, vector<8x128xf32> -> vector<8x128xf32>
    %cst_7 = arith.constant 0.000000e+00 : f32
    %8 = vector.broadcast %cst_7 : f32 to vector<8x128xf32>
    %9 = arith.maximumf %7, %8 : vector<8x128xf32>
    %cst_8 = arith.constant dense<0.000000e+00> : vector<8x128xf32>
    %10 = tpu.matmul %9, %3, %cst_8 {dimension_numbers = #tpu.dot_dimension_numbers<[1], [0], [0], [1], [0, 0, 1, 1], [], []>} : vector<8x128xf32>, vector<128x128xf32>, vector<8x128xf32> -> vector<8x128xf32>
    %c0_9 = arith.constant 0 : index
    %c0_10 = arith.constant 0 : index
    %11 = vector.load %arg2[%c0_9, %c0_10] : memref<8x256xf32, #tpu.memory_space<vmem>>, vector<8x128xf32>
    tpu.vector_store %arg2[%c0_9, %c0_10], %7 {strides = array<i32>} : memref<8x256xf32, #tpu.memory_space<vmem>>, vector<8x128xf32>,
    %c0_11 = arith.constant 0 : index
    %c128_12 = arith.constant 128 : index
    %12 = vector.load %arg2[%c0_11, %c128_12] : memref<8x256xf32, #tpu.memory_space<vmem>>, vector<8x128xf32>
    tpu.vector_store %arg2[%c0_11, %c128_12], %10 {strides = array<i32>} : memref<8x256xf32, #tpu.memory_space<vmem>>, vector<8x128xf32>,
    return
  }
}

</mosaic_0001>

<llo_original>
// kernel: network_compressor_forward.1
$region0: #{network_compressor_forward.1}
  #allocation0 [shape = 'u32[]', space=smem, size = 0x4, offset = 0x4, fixed_abs, tag = 'smem constant byte address 0x4 - core index']
  #allocation1 [shape = 'u32[144,128]{1,0:T(1,128)}', space=vmem, size = 0x12000, scoped, tag = 'internal scratch']
  %s0 = inlined_call_operand.vmem [shape: f32[8,128], index: 0, kind: input, shape index: {}]
  %s1 = inlined_call_operand.hbm [shape: f32[384,128], index: 1, kind: input, shape index: {}]
  %s2 = inlined_call_operand.vmem [shape: f32[8,256], index: 2, kind: output, shape index: {}]
  %s3 = sld [smem:[#allocation0]]
  $region22: #{network_compressor_forward.1} parent=0
    _
  %s5 = ssub.s32 1, %s3
  %s6 = scalar_select 0, %s5, %s3
  $region1: #{network_compressor_forward.1} parent=0
    #allocation2 [shape = 'u8[196608]{0}', space=vmem, size = 0x30000, scoped, tag = 'input window, operand 1, single buffered']
    #allocation3 [shape = 's32[1]{0}', space=sflag, size = 0x4, scoped, tag = 'scoped memory for network_compressor_forward.1']
    %7 = vsyncpa [#allocation3], 0
    // Predicated region
    $region2: #{network_compressor_forward.1} parent=1 // pred_check
      _
    $region3: #{network_compressor_forward.1} parent=1 // pred_check_branch
      %9 = sbr.rel (0) target = $region5
    $region4: #{network_compressor_forward.1} parent=1 // pred_region
      _
    $region5: #{network_compressor_forward.1} parent=1 // pred_fallthru
      _
    // Predicated region
    $region6: #{network_compressor_forward.1} parent=1 // pred_check
      _
    $region7: #{network_compressor_forward.1} parent=1 // pred_check_branch
      %11 = sbr.rel (0) target = $region9
    $region8: #{network_compressor_forward.1} parent=1 // pred_region
      %s13 = ssub.s32 6144, 6144
      %14 = vsyncadd [#allocation3], %s13
      %s15 = sshll.u32 [#allocation2], 4
      %s16 = int_to_ptr.vmem [resolvable:$true] %s15
      %21 = dma.hbm_to_vmem [thread:$0]  %s1, 6144, %s16, [#allocation3], 128, 128, 8
    $region9: #{network_compressor_forward.1} parent=1 // pred_fallthru
      _
    // Predicated region
    $region10: #{network_compressor_forward.1} parent=1 // pred_check
      _
    $region11: #{network_compressor_forward.1} parent=1 // pred_check_branch
      %23 = sbr.rel (0) target = $region13
    $region12: #{network_compressor_forward.1} parent=1 // pred_region
      %24 = dma.done [#allocation3], 6144
    $region13: #{network_compressor_forward.1} parent=1 // pred_fallthru
      _
    %v25 = vld [vmem:[%s0] sm:$0xff]
    %v26 = vld [vmem:[#allocation2] sm:$0xff]
    %v27 = vld [vmem:[#allocation2 + $0x8] sm:$0xff]
    %v28 = vld [vmem:[#allocation2 + $0x10] sm:$0xff]
    %v29 = vld [vmem:[#allocation2 + $0x18] sm:$0xff]
    %v30 = vld [vmem:[#allocation2 + $0x20] sm:$0xff]
    %v31 = vld [vmem:[#allocation2 + $0x28] sm:$0xff]
    %v32 = vld [vmem:[#allocation2 + $0x30] sm:$0xff]
    %v33 = vld [vmem:[#allocation2 + $0x38] sm:$0xff]
    %v34 = vld [vmem:[#allocation2 + $0x40] sm:$0xff]
    %v35 = vld [vmem:[#allocation2 + $0x48] sm:$0xff]
    %v36 = vld [vmem:[#allocation2 + $0x50] sm:$0xff]
    %v37 = vld [vmem:[#allocation2 + $0x58] sm:$0xff]
    %v38 = vld [vmem:[#allocation2 + $0x60] sm:$0xff]
    %v39 = vld [vmem:[#allocation2 + $0x68] sm:$0xff]
    %v40 = vld [vmem:[#allocation2 + $0x70] sm:$0xff]
    %v41 = vld [vmem:[#allocation2 + $0x78] sm:$0xff]
    %v42 = vld [vmem:[#allocation2 + $0x80] sm:$0xff]
    %v43 = vld [vmem:[#allocation2 + $0x88] sm:$0xff]
    %v44 = vld [vmem:[#allocation2 + $0x90] sm:$0xff]
    %v45 = vld [vmem:[#allocation2 + $0x98] sm:$0xff]
    %v46 = vld [vmem:[#allocation2 + $0xa0] sm:$0xff]
    %v47 = vld [vmem:[#allocation2 + $0xa8] sm:$0xff]
    %v48 = vld [vmem:[#allocation2 + $0xb0] sm:$0xff]
    %v49 = vld [vmem:[#allocation2 + $0xb8] sm:$0xff]
    %v50 = vld [vmem:[#allocation2 + $0xc0] sm:$0xff]
    %v51 = vld [vmem:[#allocation2 + $0xc8] sm:$0xff]
    %v52 = vld [vmem:[#allocation2 + $0xd0] sm:$0xff]
    %v53 = vld [vmem:[#allocation2 + $0xd8] sm:$0xff]
    %v54 = vld [vmem:[#allocation2 + $0xe0] sm:$0xff]
    %v55 = vld [vmem:[#allocation2 + $0xe8] sm:$0xff]
    %v56 = vld [vmem:[#allocation2 + $0xf0] sm:$0xff]
    %v57 = vld [vmem:[#allocation2 + $0xf8] sm:$0xff]
    %v58 = vld [vmem:[#allocation2 + $0x100] sm:$0xff]
    %v59 = vld [vmem:[#allocation2 + $0x108] sm:$0xff]
    %v60 = vld [vmem:[#allocation2 + $0x110] sm:$0xff]
    %v61 = vld [vmem:[#allocation2 + $0x118] sm:$0xff]
    %v62 = vld [vmem:[#allocation2 + $0x120] sm:$0xff]
    %v63 = vld [vmem:[#allocation2 + $0x128] sm:$0xff]
    %v64 = vld [vmem:[#allocation2 + $0x130] sm:$0xff]
    %v65 = vld [vmem:[#allocation2 + $0x138] sm:$0xff]
    %v66 = vld [vmem:[#allocation2 + $0x140] sm:$0xff]
    %v67 = vld [vmem:[#allocation2 + $0x148] sm:$0xff]
    %v68 = vld [vmem:[#allocation2 + $0x150] sm:$0xff]
    %v69 = vld [vmem:[#allocation2 + $0x158] sm:$0xff]
    %v70 = vld [vmem:[#allocation2 + $0x160] sm:$0xff]
    %v71 = vld [vmem:[#allocation2 + $0x168] sm:$0xff]
    %v72 = vld [vmem:[#allocation2 + $0x170] sm:$0xff]
    %v73 = vld [vmem:[#allocation2 + $0x178] sm:$0xff]
    %74 = vmatprep.subr.mxu0 0.0
    %75 = vmatpush1.msra.mxu0 %v26
    %76 = vmatprep.subr.mxu0 0.0
    %77 = vmatpush1.msra.mxu0 %v27
    %78 = vmatprep.subr.mxu0 0.0
    %79 = vmatpush1.msra.mxu0 %v28
    %80 = vmatprep.subr.mxu0 0.0
    %81 = vmatpush1.msra.mxu0 %v29
    %82 = vmatprep.subr.mxu0 0.0
    %83 = vmatpush1.msra.mxu0 %v30
    %84 = vmatprep.subr.mxu0 0.0
    %85 = vmatpush1.msra.mxu0 %v31
    %86 = vmatprep.subr.mxu0 0.0
    %87 = vmatpush1.msra.mxu0 %v32
    %88 = vmatprep.subr.mxu0 0.0
    %89 = vmatpush1.msra.mxu0 %v33
    %90 = vmatprep.subr.mxu0 0.0
    %91 = vmatpush1.msra.mxu0 %v34
    %92 = vmatprep.subr.mxu0 0.0
    %93 = vmatpush1.msra.mxu0 %v35
    %94 = vmatprep.subr.mxu0 0.0
    %95 = vmatpush1.msra.mxu0 %v36
    %96 = vmatprep.subr.mxu0 0.0
    %97 = vmatpush1.msra.mxu0 %v37
    %98 = vmatprep.subr.mxu0 0.0
    %99 = vmatpush1.msra.mxu0 %v38
    %100 = vmatprep.subr.mxu0 0.0
    %101 = vmatpush1.msra.mxu0 %v39
    %102 = vmatprep.subr.mxu0 0.0
    %103 = vmatpush1.msra.mxu0 %v40
    %104 = vmatprep.subr.mxu0 0.0
    %105 = vmatpush1.msra.mxu0 %v41
    %106 = vmatprep.subr.mxu0 0.0
    %107 = vmatpush1.msra.mxu0 0.0
    %108 = vmatprep.subr.mxu0 0.0
    %109 = vmatpush1.msra.mxu0 0.0
    %110 = vmatprep.subr.mxu0 0.0
    %111 = vmatpush1.msra.mxu0 0.0
    %112 = vmatprep.subr.mxu0 0.0
    %113 = vmatpush1.msra.mxu0 0.0
    %114 = vmatprep.subr.mxu0 0.0
    %115 = vmatpush1.msra.mxu0 0.0
    %116 = vmatprep.subr.mxu0 0.0
    %117 = vmatpush1.msra.mxu0 0.0
    %118 = vmatprep.subr.mxu0 0.0
    %119 = vmatpush1.msra.mxu0 0.0
    %120 = vmatprep.subr.mxu0 0.0
    %121 = vmatpush1.msra.mxu0 0.0
    %122 = vmatprep.subr.mxu0 0.0
    %123 = vmatpush1.msra.mxu0 0.0
    %124 = vmatprep.subr.mxu0 0.0
    %125 = vmatpush1.msra.mxu0 0.0
    %126 = vmatprep.subr.mxu0 0.0
    %127 = vmatpush1.msra.mxu0 0.0
    %128 = vmatprep.subr.mxu0 0.0
    %129 = vmatpush1.msra.mxu0 0.0
    %130 = vmatprep.subr.mxu0 0.0
    %131 = vmatpush1.msra.mxu0 0.0
    %132 = vmatprep.subr.mxu0 0.0
    %133 = vmatpush1.msra.mxu0 0.0
    %134 = vmatprep.subr.mxu0 0.0
    %135 = vmatpush1.msra.mxu0 0.0
    %136 = vmatprep.subr.mxu0 0.0
    %137 = vmatpush1.msra.mxu0 0.0
    %138 = vmatprep.mubr.f32.mxu0 0.0
    %139 = vmatmul.mubr.f32.gmra.mrb[0].mxu0 %v25
    %v140 = vpop.f32.mrb[0].mxu0
    %v141 = vadd.f32 0.0, %v140
    %v142 = vpop.f32.mrb[0].mxu0
    %143 = vdwg.mxu0
    %v144 = vmax.f32 %v141, 0.0
    %145 = vmatprep.subr.mxu0 0.0
    %146 = vmatpush1.msra.mxu0 %v42
    %147 = vmatprep.subr.mxu0 0.0
    %148 = vmatpush1.msra.mxu0 %v43
    %149 = vmatprep.subr.mxu0 0.0
    %150 = vmatpush1.msra.mxu0 %v44
    %151 = vmatprep.subr.mxu0 0.0
    %152 = vmatpush1.msra.mxu0 %v45
    %153 = vmatprep.subr.mxu0 0.0
    %154 = vmatpush1.msra.mxu0 %v46
    %155 = vmatprep.subr.mxu0 0.0
    %156 = vmatpush1.msra.mxu0 %v47
    %157 = vmatprep.subr.mxu0 0.0
    %158 = vmatpush1.msra.mxu0 %v48
    %159 = vmatprep.subr.mxu0 0.0
    %160 = vmatpush1.msra.mxu0 %v49
    %161 = vmatprep.subr.mxu0 0.0
    %162 = vmatpush1.msra.mxu0 %v50
    %163 = vmatprep.subr.mxu0 0.0
    %164 = vmatpush1.msra.mxu0 %v51
    %165 = vmatprep.subr.mxu0 0.0
    %166 = vmatpush1.msra.mxu0 %v52
    %167 = vmatprep.subr.mxu0 0.0
    %168 = vmatpush1.msra.mxu0 %v53
    %169 = vmatprep.subr.mxu0 0.0
    %170 = vmatpush1.msra.mxu0 %v54
    %171 = vmatprep.subr.mxu0 0.0
    %172 = vmatpush1.msra.mxu0 %v55
    %173 = vmatprep.subr.mxu0 0.0
    %174 = vmatpush1.msra.mxu0 %v56
    %175 = vmatprep.subr.mxu0 0.0
    %176 = vmatpush1.msra.mxu0 %v57
    %177 = vmatprep.subr.mxu0 0.0
    %178 = vmatpush1.msra.mxu0 0.0
    %179 = vmatprep.subr.mxu0 0.0
    %180 = vmatpush1.msra.mxu0 0.0
    %181 = vmatprep.subr.mxu0 0.0
    %182 = vmatpush1.msra.mxu0 0.0
    %183 = vmatprep.subr.mxu0 0.0
    %184 = vmatpush1.msra.mxu0 0.0
    %185 = vmatprep.subr.mxu0 0.0
    %186 = vmatpush1.msra.mxu0 0.0
    %187 = vmatprep.subr.mxu0 0.0
    %188 = vmatpush1.msra.mxu0 0.0
    %189 = vmatprep.subr.mxu0 0.0
    %190 = vmatpush1.msra.mxu0 0.0
    %191 = vmatprep.subr.mxu0 0.0
    %192 = vmatpush1.msra.mxu0 0.0
    %193 = vmatprep.subr.mxu0 0.0
    %194 = vmatpush1.msra.mxu0 0.0
    %195 = vmatprep.subr.mxu0 0.0
    %196 = vmatpush1.msra.mxu0 0.0
    %197 = vmatprep.subr.mxu0 0.0
    %198 = vmatpush1.msra.mxu0 0.0
    %199 = vmatprep.subr.mxu0 0.0
    %200 = vmatpush1.msra.mxu0 0.0
    %201 = vmatprep.subr.mxu0 0.0
    %202 = vmatpush1.msra.mxu0 0.0
    %203 = vmatprep.subr.mxu0 0.0
    %204 = vmatpush1.msra.mxu0 0.0
    %205 = vmatprep.subr.mxu0 0.0
    %206 = vmatpush1.msra.mxu0 0.0
    %207 = vmatprep.subr.mxu0 0.0
    %208 = vmatpush1.msra.mxu0 0.0
    %209 = vmatprep.mubr.f32.mxu0 0.0
    %210 = vmatmul.mubr.f32.gmra.mrb[0].mxu0 %v144
    %v211 = vpop.f32.mrb[0].mxu0
    %v212 = vadd.f32 0.0, %v211
    %v213 = vpop.f32.mrb[0].mxu0
    %214 = vdwg.mxu0
    %v215 = vmax.f32 %v212, 0.0
    %216 = vmatprep.subr.mxu0 0.0
    %217 = vmatpush1.msra.mxu0 %v58
    %218 = vmatprep.subr.mxu0 0.0
    %219 = vmatpush1.msra.mxu0 %v59
    %220 = vmatprep.subr.mxu0 0.0
    %221 = vmatpush1.msra.mxu0 %v60
    %222 = vmatprep.subr.mxu0 0.0
    %223 = vmatpush1.msra.mxu0 %v61
    %224 = vmatprep.subr.mxu0 0.0
    %225 = vmatpush1.msra.mxu0 %v62
    %226 = vmatprep.subr.mxu0 0.0
    %227 = vmatpush1.msra.mxu0 %v63
    %228 = vmatprep.subr.mxu0 0.0
    %229 = vmatpush1.msra.mxu0 %v64
    %230 = vmatprep.subr.mxu0 0.0
    %231 = vmatpush1.msra.mxu0 %v65
    %232 = vmatprep.subr.mxu0 0.0
    %233 = vmatpush1.msra.mxu0 %v66
    %234 = vmatprep.subr.mxu0 0.0
    %235 = vmatpush1.msra.mxu0 %v67
    %236 = vmatprep.subr.mxu0 0.0
    %237 = vmatpush1.msra.mxu0 %v68
    %238 = vmatprep.subr.mxu0 0.0
    %239 = vmatpush1.msra.mxu0 %v69
    %240 = vmatprep.subr.mxu0 0.0
    %241 = vmatpush1.msra.mxu0 %v70
    %242 = vmatprep.subr.mxu0 0.0
    %243 = vmatpush1.msra.mxu0 %v71
    %244 = vmatprep.subr.mxu0 0.0
    %245 = vmatpush1.msra.mxu0 %v72
    %246 = vmatprep.subr.mxu0 0.0
    %247 = vmatpush1.msra.mxu0 %v73
    %248 = vmatprep.subr.mxu0 0.0
    %249 = vmatpush1.msra.mxu0 0.0
    %250 = vmatprep.subr.mxu0 0.0
    %251 = vmatpush1.msra.mxu0 0.0
    %252 = vmatprep.subr.mxu0 0.0
    %253 = vmatpush1.msra.mxu0 0.0
    %254 = vmatprep.subr.mxu0 0.0
    %255 = vmatpush1.msra.mxu0 0.0
    %256 = vmatprep.subr.mxu0 0.0
    %257 = vmatpush1.msra.mxu0 0.0
    %258 = vmatprep.subr.mxu0 0.0
    %259 = vmatpush1.msra.mxu0 0.0
    %260 = vmatprep.subr.mxu0 0.0
    %261 = vmatpush1.msra.mxu0 0.0
    %262 = vmatprep.subr.mxu0 0.0
    %263 = vmatpush1.msra.mxu0 0.0
    %264 = vmatprep.subr.mxu0 0.0
    %265 = vmatpush1.msra.mxu0 0.0
    %266 = vmatprep.subr.mxu0 0.0
    %267 = vmatpush1.msra.mxu0 0.0
    %268 = vmatprep.subr.mxu0 0.0
    %269 = vmatpush1.msra.mxu0 0.0
    %270 = vmatprep.subr.mxu0 0.0
    %271 = vmatpush1.msra.mxu0 0.0
    %272 = vmatprep.subr.mxu0 0.0
    %273 = vmatpush1.msra.mxu0 0.0
    %274 = vmatprep.subr.mxu0 0.0
    %275 = vmatpush1.msra.mxu0 0.0
    %276 = vmatprep.subr.mxu0 0.0
    %277 = vmatpush1.msra.mxu0 0.0
    %278 = vmatprep.subr.mxu0 0.0
    %279 = vmatpush1.msra.mxu0 0.0
    %280 = vmatprep.mubr.f32.mxu0 0.0
    %281 = vmatmul.mubr.f32.gmra.mrb[0].mxu0 %v215
    %v282 = vpop.f32.mrb[0].mxu0
    %v283 = vadd.f32 0.0, %v282
    %v284 = vpop.f32.mrb[0].mxu0
    %285 = vdwg.mxu0
    %286 = vst [vmem:[%s2] sm:$0xff] %v212
    %287 = vst [vmem:[%s2 + $0x8] sm:$0xff] %v283
    // Predicated region
    $region14: #{network_compressor_forward.1} parent=1 // pred_check
      _
    $region15: #{network_compressor_forward.1} parent=1 // pred_check_branch
      %289 = sbr.rel (0) target = $region17
    $region16: #{network_compressor_forward.1} parent=1 // pred_region
      _
    $region17: #{network_compressor_forward.1} parent=1 // pred_fallthru
      _
    // Predicated region
    $region18: #{network_compressor_forward.1} parent=1 // pred_check
      _
    $region19: #{network_compressor_forward.1} parent=1 // pred_check_branch
      %291 = sbr.rel (0) target = $region21
    $region20: #{network_compressor_forward.1} parent=1 // pred_region
      _
    $region21: #{network_compressor_forward.1} parent=1 // pred_fallthru
      _
    %292 = vsyncpa [#allocation3], 1

</llo_original>
